<compile_context>
chip_gen: v6e
topology: v6e:2x2x1
jax: 0.10.0
libtpu: 0.0.40
codegen_flags: <defaults>
</compile_context>

<pallas_src>
import jax
import jax.numpy as jnp
from jax.experimental import pallas as pl
from jax.experimental.pallas import tpu as pltpu

LANES = 128
MAX_ROW_TILE = 4096  # 4096 x 128 f32 block = 2 MiB (1 MiB for bf16)


def _round_up(v, m):
    return ((v + m - 1) // m) * m


def _sigmoid_kernel(params_ref, x_ref, o_ref):
    # params_ref lives in SMEM: [p0, p1]; read scalars once.
    a = params_ref[0]
    b = params_ref[1]
    # Cast to f32 inside the kernel (VPU has no bf16 math on v5e); divide is
    # fully hidden under the DMA for this memory-bound kernel.
    x = x_ref[...].astype(jnp.float32)
    y = 1.0 / (1.0 + jnp.exp(a * (x + b)))
    o_ref[...] = y.astype(o_ref.dtype)


def tonemap_sigmoid(x, params):
    """x: any-shape float array (NCHW in the reference). params: shape (2,)."""
    orig_shape = x.shape
    orig_dtype = x.dtype

    flat = x.reshape(-1)  # keep native dtype for HBM traffic
    n = flat.shape[0]

    # Pad only to a multiple of the lane width (at most 127 extra elements).
    padded_n = _round_up(n, LANES)
    if padded_n != n:
        flat = jnp.pad(flat, (0, padded_n - n))
    rows = padded_n // LANES
    x2d = flat.reshape(rows, LANES)

    # Big lane-dense blocks to amortize per-grid-step overhead; clamp to the
    # (sublane-aligned) array size for small inputs. Sublane multiple depends
    # on dtype packing: f32 -> 8, bf16 -> 16, int8/fp8 -> 32.
    itemsize = jnp.dtype(orig_dtype).itemsize
    sublane = {1: 32, 2: 16}.get(itemsize, 8)
    row_tile = min(MAX_ROW_TILE, _round_up(rows, sublane))
    grid = (pl.cdiv(rows, row_tile),)

    out2d = pl.pallas_call(
        _sigmoid_kernel,
        out_shape=jax.ShapeDtypeStruct((rows, LANES), orig_dtype),
        grid=grid,
        in_specs=[
            pl.BlockSpec(memory_space=pltpu.MemorySpace.SMEM),    # params (scalars)
            pl.BlockSpec((row_tile, LANES), lambda i: (i, 0)),    # x block
        ],
        out_specs=pl.BlockSpec((row_tile, LANES), lambda i: (i, 0)),
        compiler_params=pltpu.CompilerParams(
            dimension_semantics=("parallel",),
        ),
    )(params.astype(jnp.float32), x2d)

    return out2d.reshape(-1)[:n].reshape(orig_shape)


if __name__ == "__main__":
    key = jax.random.PRNGKey(0)

    # Deterministic parameter init, matching torch.nn.Parameter(torch.Tensor([1, 0]))
    params = jnp.array([1.0, 0.0], dtype=jnp.float32)

    # Small NCHW input consistent with the module's usage.
    x = jax.random.normal(key, (2, 4, 16, 16), dtype=jnp.float32)

    out = tonemap_sigmoid(x, params)
    out = jax.block_until_ready(out)

    # Reference check in plain JAX.
    ref = 1.0 / (1.0 + jnp.exp(params[0] * (x + params[1])))
    assert out.shape == x.shape
    assert out.dtype == x.dtype
    assert jnp.allclose(out, ref, atol=1e-6), "mismatch vs reference"

    print("KERNEL_OK")
</pallas_src>

<mosaic_0001>
module attributes {stable_mosaic.version = 11 : i64} {
  func.func @_sigmoid_kernel(%arg0: i32, %arg1: memref<2xf32, #tpu.memory_space<smem>>, %arg2: memref<16x128xf32, #tpu.memory_space<vmem>>, %arg3: memref<16x128xf32, #tpu.memory_space<vmem>>) attributes {dimension_semantics = [#tpu.dimension_semantics<parallel>], iteration_bounds = array<i64: 1>, scalar_prefetch = 0 : i64, scratch_operands = 0 : i64, tpu.core_type = #tpu.core_type<tc>, window_params = [{transform_indices = @transform_0, window_bounds = array<i64: 2>}, {transform_indices = @transform_1, window_bounds = array<i64: 16, 128>}, {transform_indices = @transform_2, window_bounds = array<i64: 16, 128>}]} {
    %c0 = arith.constant 0 : index
    %0 = memref.load %arg1[%c0] : memref<2xf32, #tpu.memory_space<smem>>
    %c1 = arith.constant 1 : index
    %1 = memref.load %arg1[%c1] : memref<2xf32, #tpu.memory_space<smem>>
    %c0_0 = arith.constant 0 : index
    %c0_1 = arith.constant 0 : index
    %2 = vector.load %arg2[%c0_0, %c0_1] : memref<16x128xf32, #tpu.memory_space<vmem>>, vector<16x128xf32>
    %3 = vector.broadcast %1 : f32 to vector<16x128xf32>
    %4 = arith.addf %2, %3 : vector<16x128xf32>
    %5 = vector.broadcast %0 : f32 to vector<16x128xf32>
    %6 = arith.mulf %5, %4 : vector<16x128xf32>
    %7 = math.exp %6 : vector<16x128xf32>
    %cst = arith.constant 1.000000e+00 : f32
    %8 = vector.broadcast %cst : f32 to vector<16x128xf32>
    %9 = arith.addf %8, %7 : vector<16x128xf32>
    %cst_2 = arith.constant 1.000000e+00 : f32
    %10 = vector.broadcast %cst_2 : f32 to vector<16x128xf32>
    %11 = arith.divf %10, %9 : vector<16x128xf32>
    %c0_3 = arith.constant 0 : index
    %c0_4 = arith.constant 0 : index
    %12 = vector.load %arg3[%c0_3, %c0_4] : memref<16x128xf32, #tpu.memory_space<vmem>>, vector<16x128xf32>
    tpu.vector_store %arg3[%c0_3, %c0_4], %11 {strides = array<i32>} : memref<16x128xf32, #tpu.memory_space<vmem>>, vector<16x128xf32>,
    return
  }
  func.func @transform_0(%arg0: i32) -> i32 {
    %c0_i32 = arith.constant 0 : i32
    %c0_i32_0 = arith.constant 0 : i32
    return %c0_i32 : i32
  }
  func.func @transform_1(%arg0: i32) -> (i32, i32) {
    %c0_i32 = arith.constant 0 : i32
    %c0_i32_0 = arith.constant 0 : i32
    return %arg0, %c0_i32 : i32, i32
  }
  func.func @transform_2(%arg0: i32) -> (i32, i32) {
    %c0_i32 = arith.constant 0 : i32
    %c0_i32_0 = arith.constant 0 : i32
    return %arg0, %c0_i32 : i32, i32
  }
}

</mosaic_0001>

<llo_original>
// kernel: tpu_custom_call.1
$region0: #{tpu_custom_call.1}
  #allocation0 [shape = 'u32[]', space=smem, size = 0x4, offset = 0x4, fixed_abs, tag = 'smem constant byte address 0x4 - core index']
  #allocation1 [shape = 'u32[144,128]{1,0:T(1,128)}', space=vmem, size = 0x12000, scoped, tag = 'internal scratch']
  %s0 = inlined_call_operand.hbm [shape: f32[2], index: 0, kind: input, shape index: {}]
  %s1 = inlined_call_operand.hbm [shape: f32[16,128], index: 1, kind: input, shape index: {}]
  %s2 = inlined_call_operand.hbm [shape: f32[16,128], index: 2, kind: output, shape index: {}]
  %s3 = sld [smem:[#allocation0]]
  $region26: #{tpu_custom_call.1} parent=0
    _
  %s5 = ssub.s32 1, %s3
  %s6 = scalar_select 0, %s5, %s3
  $region1: #{tpu_custom_call.1} parent=0
    #allocation2 [shape = 'u8[512]{0}', space=smem, size = 0x200, scoped, tag = 'input window, operand 0, single buffered']
    #allocation3 [shape = 's32[1]{0}', space=sflag, size = 0x4, scoped, tag = 'scoped memory for tpu_custom_call.1']
    #allocation4 [shape = 's32[1]{0}', space=sflag, size = 0x4, scoped, tag = 'scoped memory for tpu_custom_call.1']
    #allocation5 [shape = 's32[1]{0}', space=sflag, size = 0x4, scoped, tag = 'scoped memory for tpu_custom_call.1']
    #allocation6 [shape = 'u8[8192]{0}', space=vmem, size = 0x2000, scoped, tag = 'input window, operand 1, single buffered']
    #allocation7 [shape = 'u8[8192]{0}', space=vmem, size = 0x2000, scoped, tag = 'output window, operand 0, single buffered']
    %7 = vsyncpa [#allocation5], 0
    %8 = vsyncpa [#allocation3], 0
    %9 = vsyncpa [#allocation4], 0
    // Predicated region
    $region2: #{tpu_custom_call.1} parent=1 // pred_check
      _
    $region3: #{tpu_custom_call.1} parent=1 // pred_check_branch
      %11 = sbr.rel (0) target = $region5
    $region4: #{tpu_custom_call.1} parent=1 // pred_region
      %s13 = ssub.s32 16, 16
      %14 = vsyncadd [#allocation5], %s13
      %17 = dma.hbm_to_smem %s0, 16, [#allocation2], [#allocation5]
    $region5: #{tpu_custom_call.1} parent=1 // pred_fallthru
      _
    // Predicated region
    $region6: #{tpu_custom_call.1} parent=1 // pred_check
      _
    $region7: #{tpu_custom_call.1} parent=1 // pred_check_branch
      %19 = sbr.rel (0) target = $region9
    $region8: #{tpu_custom_call.1} parent=1 // pred_region
      %s21 = ssub.s32 256, 256
      %22 = vsyncadd [#allocation3], %s21
      %s23 = sshll.u32 [#allocation6], 4
      %s24 = int_to_ptr.vmem [resolvable:$true] %s23
      %29 = dma.hbm_to_vmem [thread:$0]  %s1, 256, %s24, [#allocation3], 128, 128, 8
    $region9: #{tpu_custom_call.1} parent=1 // pred_fallthru
      _
    // Predicated region
    $region10: #{tpu_custom_call.1} parent=1 // pred_check
      _
    $region11: #{tpu_custom_call.1} parent=1 // pred_check_branch
      %31 = sbr.rel (0) target = $region13
    $region12: #{tpu_custom_call.1} parent=1 // pred_region
      %32 = dma.done [#allocation5], 16
    $region13: #{tpu_custom_call.1} parent=1 // pred_fallthru
      _
    // Predicated region
    $region14: #{tpu_custom_call.1} parent=1 // pred_check
      _
    $region15: #{tpu_custom_call.1} parent=1 // pred_check_branch
      %34 = sbr.rel (0) target = $region17
    $region16: #{tpu_custom_call.1} parent=1 // pred_region
      %35 = dma.done [#allocation3], 256
    $region17: #{tpu_custom_call.1} parent=1 // pred_fallthru
      _
    %36 = sfence
    %s37 = sld [smem:[#allocation2]]
    %s38 = sld [smem:[#allocation2 + $0x1]]
    %v39 = vld [vmem:[#allocation6] sm:$0xff]
    %v40 = vld [vmem:[#allocation6 + $0x8] sm:$0xff]
    %v41 = vstv %s38
    %v42 = vadd.f32 %v39, %v41
    %v43 = vadd.f32 %v40, %v41
    %v44 = vstv %s37
    %v45 = vmul.f32 %v44, %v42
    %v46 = vmul.f32 %v44, %v43
    %v47 = vmul.f32 %v45, 1.442695
    %v48 = vpow.pop %v47
    %v49 = vmul.f32 %v46, 1.442695
    %v50 = vpow.pop %v49
    %v51 = vadd.f32 %v48, 1.0
    %v52 = vadd.f32 %v50, 1.0
    %v53 = vrcp.pop %v51
    %v54 = vmul.f32 1.0, %v53
    %v55 = vrcp.pop %v52
    %v56 = vmul.f32 1.0, %v55
    %57 = vst [vmem:[#allocation7] sm:$0xff] %v54
    %58 = vst [vmem:[#allocation7 + $0x8] sm:$0xff] %v56
    // Predicated region
    $region18: #{tpu_custom_call.1} parent=1 // pred_check
      _
    $region19: #{tpu_custom_call.1} parent=1 // pred_check_branch
      %60 = sbr.rel (0) target = $region21
    $region20: #{tpu_custom_call.1} parent=1 // pred_region
      %s62 = ssub.s32 256, 256
      %63 = vsyncadd [#allocation4], %s62
      %s64 = sshll.u32 [#allocation7], 4
      %s65 = int_to_ptr.vmem [resolvable:$true] %s64
      %70 = dma.vmem_to_hbm [thread:$0]  %s65, 256, %s2, [#allocation4], 128, 128, 8
    $region21: #{tpu_custom_call.1} parent=1 // pred_fallthru
      _
    // Predicated region
    $region22: #{tpu_custom_call.1} parent=1 // pred_check
      _
    $region23: #{tpu_custom_call.1} parent=1 // pred_check_branch
      %72 = sbr.rel (0) target = $region25
    $region24: #{tpu_custom_call.1} parent=1 // pred_region
      %73 = dma.done [#allocation4], 256
    $region25: #{tpu_custom_call.1} parent=1 // pred_fallthru
      _
    %74 = vsyncpa [#allocation3], 1
    %75 = vsyncpa [#allocation4], 1
    %76 = vsyncpa [#allocation5], 1

</llo_original>
